<compile_context>
chip_gen: v7x
topology: tpu7x:2x2x1
jax: 0.10.0
libtpu: 0.0.40
codegen_flags: <defaults>
</compile_context>

<pallas_src>
import functools

import jax
import jax.numpy as jnp
import numpy as np
from jax.experimental import pallas as pl
from jax.experimental.pallas import tpu as pltpu


# --------------------------------------------------------------------------- #
# Kernel
# --------------------------------------------------------------------------- #
def _encoder_kernel(x_ref, w_ref, b_ref, o_ref, *, no_imgnorm, use_abs, eps,
                    approx_recip):
    # (tm, img_dim) @ (img_dim, embed) on the MXU with f32 accumulation.
    feats = jnp.dot(x_ref[...], w_ref[...], preferred_element_type=jnp.float32)
    feats = feats + b_ref[...].astype(jnp.float32)      # bias broadcast over rows

    if not no_imgnorm:
        # l2norm over the embed (last) dim == torch dim=1 for a 2-D input.
        ssum = jnp.sum(feats * feats, axis=-1, keepdims=True)
        if approx_recip:
            # Fused single-EUP-op epilogue: 1/sqrt(s + eps^2) ≈ 1/(sqrt(s) + eps).
            feats = feats * jax.lax.rsqrt(ssum + eps * eps)
        else:
            # Exact PyTorch semantics: divide by (sqrt(s) + eps).
            feats = feats / (jnp.sqrt(ssum) + eps)

    if use_abs:
        feats = jnp.abs(feats)

    o_ref[...] = feats.astype(o_ref.dtype)


# --------------------------------------------------------------------------- #
# Wrapper helpers
# --------------------------------------------------------------------------- #
def _cdiv(a, b):
    return -(-a // b)


def _round_up(x, m):
    return ((x + m - 1) // m) * m


def _pick_tm(batch, row_align, tm_req):
    cap_rows = _round_up(max(batch, 1), row_align)
    if tm_req is not None:
        return max(row_align, min(_round_up(tm_req, row_align), cap_rows))
    if batch <= row_align:
        return row_align
    # Big MXU-friendly row tile, but keep >= 2 grid steps when the batch allows.
    tm = max(row_align, min(512, _round_up(_cdiv(batch, 2), row_align), cap_rows))
    # Prefer an even grid-step count (when > 1) so dimension_semantics=("parallel",)
    # splits the work evenly across v7x's two TensorCores.
    g = _cdiv(batch, tm)
    if g > 1 and g % 2 == 1:
        tm_alt = max(row_align, _round_up(_cdiv(batch, g + 1), row_align))
        if _cdiv(batch, tm_alt) % 2 == 0:
            tm = tm_alt
    return tm


def _vmem_need_bytes(tm, img_dim, embed, x_isz, w_isz, o_isz, w_bufs):
    return (2 * tm * img_dim * x_isz          # x tile, double-buffered
            + 2 * tm * embed * o_isz          # out tile, double-buffered
            + w_bufs * img_dim * embed * w_isz  # resident weight
            + w_bufs * embed * 4              # bias row(s)
            + 2 * tm * embed * 4)             # f32 epilogue temps (feats, feats^2)


def _run(x, w, bias2d, *, tm, kernel, out_dtype, embed_size,
         single_buffer_params, vmem_limit_bytes):
    B, img_dim = x.shape
    grid = (pl.cdiv(B, tm),)

    if single_buffer_params:
        # Constant index_map => a single resident buffer is enough.
        w_spec = pl.BlockSpec((img_dim, embed_size), lambda i: (0, 0),
                              pipeline_mode=pl.Buffered(1))
        b_spec = pl.BlockSpec((1, embed_size), lambda i: (0, 0),
                              pipeline_mode=pl.Buffered(1))
    else:
        w_spec = pl.BlockSpec((img_dim, embed_size), lambda i: (0, 0))
        b_spec = pl.BlockSpec((1, embed_size), lambda i: (0, 0))

    return pl.pallas_call(
        kernel,
        out_shape=jax.ShapeDtypeStruct((B, embed_size), out_dtype),
        grid_spec=pltpu.PrefetchScalarGridSpec(
            num_scalar_prefetch=0,
            grid=grid,
            in_specs=[
                pl.BlockSpec((tm, img_dim), lambda i: (i, 0)),   # image rows
                w_spec,                                           # full weight
                b_spec,                                           # bias row
            ],
            out_specs=pl.BlockSpec((tm, embed_size), lambda i: (i, 0)),
        ),
        compiler_params=pltpu.CompilerParams(
            dimension_semantics=("parallel",),
            vmem_limit_bytes=vmem_limit_bytes),
    )(x, w, bias2d)


# --------------------------------------------------------------------------- #
# Public entry point
# --------------------------------------------------------------------------- #
def encoder_image_precomp(images, weight_t, bias, *, no_imgnorm=False,
                          use_abs=False, eps=1e-8, tm=None, compute_dtype=None,
                          approx_recip=True, out_dtype=None,
                          vmem_limit_bytes=None):
    """images: (B, img_dim); weight_t: (img_dim, embed) == fc.weight.T; bias: (embed,).

    For the bf16 MXU path, pre-cast `weight_t` to bf16 ONCE at model init and pass
    compute_dtype=jnp.bfloat16 (only the activations are cast here per call).
    """
    B, img_dim = images.shape
    embed_size = weight_t.shape[1]
    if out_dtype is None:
        out_dtype = images.dtype

    # Per perf feedback: never re-cast the weight per call (that would read the
    # f32 weight and write a copy before the kernel even starts).
    x = images.astype(compute_dtype) if compute_dtype is not None else images
    w = weight_t

    x_isz = jnp.dtype(x.dtype).itemsize
    w_isz = jnp.dtype(w.dtype).itemsize
    o_isz = jnp.dtype(out_dtype).itemsize
    row_align = 16 if x_isz < 4 else 8

    tm = _pick_tm(B, row_align, tm)

    # Physical VMEM; conservative fallback = v7x's 64 MiB per TensorCore.
    phys = 64 << 20
    try:
        phys = int(pltpu.get_tpu_info().vmem_capacity_bytes)
    except Exception:
        pass
    cap = max(16 << 20, phys - (8 << 20))

    bias2d = bias.astype(jnp.float32).reshape(1, embed_size)
    kernel = functools.partial(
        _encoder_kernel, no_imgnorm=no_imgnorm, use_abs=use_abs, eps=eps,
        approx_recip=approx_recip)

    def attempt(w_bufs, single_buffer_params):
        t = tm
        # Shrink the row tile if the footprint would exceed the VMEM cap
        # (keeps v7x out of the spill regime for big weights / f32 inputs).
        while t > row_align and _vmem_need_bytes(
                t, img_dim, embed_size, x_isz, w_isz, o_isz, w_bufs) > cap:
            t = max(row_align, _round_up(t // 2, row_align))
        need = _vmem_need_bytes(t, img_dim, embed_size, x_isz, w_isz, o_isz, w_bufs)
        limit = vmem_limit_bytes
        if limit is None:
            limit = int(min(max(need * 5 // 4, 16 << 20), cap))
        return _run(x, w, bias2d, tm=t, kernel=kernel, out_dtype=out_dtype,
                    embed_size=embed_size,
                    single_buffer_params=single_buffer_params,
                    vmem_limit_bytes=limit)

    try:
        return attempt(w_bufs=1, single_buffer_params=True)
    except Exception:
        # Older JAX may reject pl.Buffered(1); fall back to default buffering.
        return attempt(w_bufs=2, single_buffer_params=False)


# --------------------------------------------------------------------------- #
# Pure-JAX reference (mirrors the PyTorch module)
# --------------------------------------------------------------------------- #
def reference(images, weight_t, bias, *, no_imgnorm=False, use_abs=False, eps=1e-8):
    feats = images @ weight_t + bias[None, :]
    if not no_imgnorm:
        norm = jnp.sqrt(jnp.sum(feats ** 2, axis=1, keepdims=True)) + eps
        feats = feats / norm
    if use_abs:
        feats = jnp.abs(feats)
    return feats


if __name__ == "__main__":
    # Small deterministic shapes; B=20 deliberately not a multiple of the tile
    # to exercise the ragged (masked) final grid block.
    B, img_dim, embed_size = 20, 64, 256

    key = jax.random.PRNGKey(0)
    k_img, k_w = jax.random.split(key)

    images = jax.random.normal(k_img, (B, img_dim), dtype=jnp.float32)

    # Xavier-uniform init for fc (matches module's init_weights), bias = 0.
    r = float(np.sqrt(6.0) / np.sqrt(img_dim + embed_size))
    weight_t = jax.random.uniform(
        k_w, (img_dim, embed_size), dtype=jnp.float32, minval=-r, maxval=r)
    bias = jnp.zeros((embed_size,), dtype=jnp.float32)

    ref = reference(images, weight_t, bias)

    # Exact-epilogue path: matches the f32 PyTorch semantics tightly.
    out_exact = jax.block_until_ready(
        encoder_image_precomp(images, weight_t, bias, approx_recip=False))
    np.testing.assert_allclose(np.asarray(out_exact), np.asarray(ref),
                               rtol=1e-5, atol=1e-5)

    # Default fast path: fused rsqrt epilogue (eps moved inside the sqrt).
    out_fast = jax.block_until_ready(
        encoder_image_precomp(images, weight_t, bias))
    np.testing.assert_allclose(np.asarray(out_fast), np.asarray(ref),
                               rtol=2e-3, atol=2e-3)

    # use_abs / no_imgnorm variant.
    ref_abs = reference(images, weight_t, bias, no_imgnorm=True, use_abs=True)
    out_abs = jax.block_until_ready(
        encoder_image_precomp(images, weight_t, bias, no_imgnorm=True,
                              use_abs=True, approx_recip=False))
    np.testing.assert_allclose(np.asarray(out_abs), np.asarray(ref_abs),
                               rtol=1e-5, atol=1e-5)

    # bf16 MXU path: weight pre-cast ONCE (as a model-init cache would do),
    # activations cast per call; accumulation + epilogue stay f32.
    weight_bf16 = weight_t.astype(jnp.bfloat16)
    out_bf16 = jax.block_until_ready(
        encoder_image_precomp(images, weight_bf16, bias,
                              compute_dtype=jnp.bfloat16))
    np.testing.assert_allclose(np.asarray(out_bf16), np.asarray(ref),
                               rtol=3e-2, atol=3e-2)

    print("KERNEL_OK")
</pallas_src>

<mosaic_0001>
module attributes {stable_mosaic.version = 11 : i64} {
  func.func @_encoder_kernel(%arg0: i32, %arg1: memref<16x64xf32, #tpu.memory_space<vmem>>, %arg2: memref<64x256xf32, #tpu.memory_space<vmem>>, %arg3: memref<1x256xf32, #tpu.memory_space<vmem>>, %arg4: memref<16x256xf32, #tpu.memory_space<vmem>>) attributes {dimension_semantics = [#tpu.dimension_semantics<parallel>], iteration_bounds = array<i64: 2>, scalar_prefetch = 0 : i64, scratch_operands = 0 : i64, tpu.core_type = #tpu.core_type<tc>, window_params = [{transform_indices = @transform_0, window_bounds = array<i64: 16, 64>}, {pipeline_mode = #tpu.pipeline_mode<synchronous>, transform_indices = @transform_1, window_bounds = array<i64: 64, 256>}, {pipeline_mode = #tpu.pipeline_mode<synchronous>, transform_indices = @transform_2, window_bounds = array<i64: 1, 256>}, {transform_indices = @transform_3, window_bounds = array<i64: 16, 256>}]} {
    %c0 = arith.constant 0 : index
    %c0_0 = arith.constant 0 : index
    %0 = vector.load %arg1[%c0, %c0_0] : memref<16x64xf32, #tpu.memory_space<vmem>>, vector<16x64xf32>
    %c0_1 = arith.constant 0 : index
    %c0_2 = arith.constant 0 : index
    %1 = vector.load %arg2[%c0_1, %c0_2] : memref<64x256xf32, #tpu.memory_space<vmem>>, vector<64x256xf32>
    %cst = arith.constant dense<0.000000e+00> : vector<16x256xf32>
    %2 = tpu.matmul %0, %1, %cst {dimension_numbers = #tpu.dot_dimension_numbers<[1], [0], [0], [1], [0, 0, 1, 1], [], []>} : vector<16x64xf32>, vector<64x256xf32>, vector<16x256xf32> -> vector<16x256xf32>
    %c0_3 = arith.constant 0 : index
    %c0_4 = arith.constant 0 : index
    %3 = vector.load %arg3[%c0_3, %c0_4] : memref<1x256xf32, #tpu.memory_space<vmem>>, vector<1x256xf32>
    %4 = vector.broadcast %3 : vector<1x256xf32> to vector<16x256xf32>
    %5 = arith.addf %2, %4 : vector<16x256xf32>
    %6 = arith.mulf %5, %5 : vector<16x256xf32>
    %cst_5 = arith.constant dense<0.000000e+00> : vector<16xf32>
    %7 = vector.multi_reduction <add>, %6, %cst_5 [1] : vector<16x256xf32> to vector<16xf32>
    %8 = vector.shape_cast %7 : vector<16xf32> to vector<16x1xf32>
    %9 = math.sqrt %8 : vector<16x1xf32>
    %cst_6 = arith.constant 9.99999993E-9 : f32
    %10 = vector.broadcast %cst_6 : f32 to vector<16x1xf32>
    %11 = arith.addf %9, %10 : vector<16x1xf32>
    %12 = vector.broadcast %11 : vector<16x1xf32> to vector<16x256xf32>
    %13 = arith.divf %5, %12 : vector<16x256xf32>
    %c0_7 = arith.constant 0 : index
    %c0_8 = arith.constant 0 : index
    %14 = vector.load %arg4[%c0_7, %c0_8] : memref<16x256xf32, #tpu.memory_space<vmem>>, vector<16x256xf32>
    tpu.vector_store %arg4[%c0_7, %c0_8], %13 {strides = array<i32>} : memref<16x256xf32, #tpu.memory_space<vmem>>, vector<16x256xf32>,
    return
  }
  func.func @transform_0(%arg0: i32) -> (i32, i32) {
    %c0_i32 = arith.constant 0 : i32
    %c0_i32_0 = arith.constant 0 : i32
    return %arg0, %c0_i32 : i32, i32
  }
  func.func @transform_1(%arg0: i32) -> (i32, i32) {
    %c0_i32 = arith.constant 0 : i32
    %c0_i32_0 = arith.constant 0 : i32
    %c0_i32_1 = arith.constant 0 : i32
    return %c0_i32, %c0_i32_0 : i32, i32
  }
  func.func @transform_2(%arg0: i32) -> (i32, i32) {
    %c0_i32 = arith.constant 0 : i32
    %c0_i32_0 = arith.constant 0 : i32
    %c0_i32_1 = arith.constant 0 : i32
    return %c0_i32, %c0_i32_0 : i32, i32
  }
  func.func @transform_3(%arg0: i32) -> (i32, i32) {
    %c0_i32 = arith.constant 0 : i32
    %c0_i32_0 = arith.constant 0 : i32
    return %arg0, %c0_i32 : i32, i32
  }
}

module attributes {stable_mosaic.version = 11 : i64} {
  func.func @_encoder_kernel(%arg0: i32, %arg1: memref<16x64xf32, #tpu.memory_space<vmem>>, %arg2: memref<64x256xf32, #tpu.memory_space<vmem>>, %arg3: memref<1x256xf32, #tpu.memory_space<vmem>>, %arg4: memref<16x256xf32, #tpu.memory_space<vmem>>) attributes {dimension_semantics = [#tpu.dimension_semantics<parallel>], iteration_bounds = array<i64: 2>, scalar_prefetch = 0 : i64, scratch_operands = 0 : i64, tpu.core_type = #tpu.core_type<tc>, window_params = [{transform_indices = @transform_0, window_bounds = array<i64: 16, 64>}, {pipeline_mode = #tpu.pipeline_mode<synchronous>, transform_indices = @transform_1, window_bounds = array<i64: 64, 256>}, {pipeline_mode = #tpu.pipeline_mode<synchronous>, transform_indices = @transform_2, window_bounds = array<i64: 1, 256>}, {transform_indices = @transform_3, window_bounds = array<i64: 16, 256>}]} {
    %c0 = arith.constant 0 : index
    %c0_0 = arith.constant 0 : index
    %0 = vector.load %arg1[%c0, %c0_0] : memref<16x64xf32, #tpu.memory_space<vmem>>, vector<16x64xf32>
    %c0_1 = arith.constant 0 : index
    %c0_2 = arith.constant 0 : index
    %1 = vector.load %arg2[%c0_1, %c0_2] : memref<64x256xf32, #tpu.memory_space<vmem>>, vector<64x256xf32>
    %cst = arith.constant dense<0.000000e+00> : vector<16x256xf32>
    %2 = tpu.matmul %0, %1, %cst {dimension_numbers = #tpu.dot_dimension_numbers<[1], [0], [0], [1], [0, 0, 1, 1], [], []>} : vector<16x64xf32>, vector<64x256xf32>, vector<16x256xf32> -> vector<16x256xf32>
    %c0_3 = arith.constant 0 : index
    %c0_4 = arith.constant 0 : index
    %3 = vector.load %arg3[%c0_3, %c0_4] : memref<1x256xf32, #tpu.memory_space<vmem>>, vector<1x256xf32>
    %4 = vector.broadcast %3 : vector<1x256xf32> to vector<16x256xf32>
    %5 = arith.addf %2, %4 : vector<16x256xf32>
    %6 = arith.mulf %5, %5 : vector<16x256xf32>
    %cst_5 = arith.constant dense<0.000000e+00> : vector<16xf32>
    %7 = vector.multi_reduction <add>, %6, %cst_5 [1] : vector<16x256xf32> to vector<16xf32>
    %8 = vector.shape_cast %7 : vector<16xf32> to vector<16x1xf32>
    %9 = math.sqrt %8 : vector<16x1xf32>
    %cst_6 = arith.constant 9.99999993E-9 : f32
    %10 = vector.broadcast %cst_6 : f32 to vector<16x1xf32>
    %11 = arith.addf %9, %10 : vector<16x1xf32>
    %12 = vector.broadcast %11 : vector<16x1xf32> to vector<16x256xf32>
    %13 = arith.divf %5, %12 : vector<16x256xf32>
    %c0_7 = arith.constant 0 : index
    %c0_8 = arith.constant 0 : index
    %14 = vector.load %arg4[%c0_7, %c0_8] : memref<16x256xf32, #tpu.memory_space<vmem>>, vector<16x256xf32>
    tpu.vector_store %arg4[%c0_7, %c0_8], %13 {strides = array<i32>} : memref<16x256xf32, #tpu.memory_space<vmem>>, vector<16x256xf32>,
    return
  }
  func.func @transform_0(%arg0: i32) -> (i32, i32) {
    %c0_i32 = arith.constant 0 : i32
    %c0_i32_0 = arith.constant 0 : i32
    return %arg0, %c0_i32 : i32, i32
  }
  func.func @transform_1(%arg0: i32) -> (i32, i32) {
    %c0_i32 = arith.constant 0 : i32
    %c0_i32_0 = arith.constant 0 : i32
    %c0_i32_1 = arith.constant 0 : i32
    return %c0_i32, %c0_i32_0 : i32, i32
  }
  func.func @transform_2(%arg0: i32) -> (i32, i32) {
    %c0_i32 = arith.constant 0 : i32
    %c0_i32_0 = arith.constant 0 : i32
    %c0_i32_1 = arith.constant 0 : i32
    return %c0_i32, %c0_i32_0 : i32, i32
  }
  func.func @transform_3(%arg0: i32) -> (i32, i32) {
    %c0_i32 = arith.constant 0 : i32
    %c0_i32_0 = arith.constant 0 : i32
    return %arg0, %c0_i32 : i32, i32
  }
}

</mosaic_0001>

<llo_original>
// kernel: tpu_custom_call.1
$region0: #{tpu_custom_call.1}
  #allocation0 [shape = 'u32[]', space=smem, size = 0x4, offset = 0x4, fixed_abs, tag = 'smem constant byte address 0x4 - core index']
  #allocation1 [shape = 'u32[144,128]{1,0:T(1,128)}', space=vmem, size = 0x12000, scoped, tag = 'internal scratch']
  %s0 = inlined_call_operand.hbm [shape: f32[20,64], index: 0, kind: input, shape index: {}]
  %s1 = inlined_call_operand.hbm [shape: f32[64,256], index: 1, kind: input, shape index: {}]
  %s2 = inlined_call_operand.vmem [shape: f32[1,256], index: 2, kind: input, shape index: {}]
  %s3 = inlined_call_operand.hbm [shape: f32[20,256], index: 3, kind: output, shape index: {}]
  %s4 = sld [smem:[#allocation0]]
  $region53: #{tpu_custom_call.1} parent=0
    _
  %s6 = ssub.s32 1, %s4
  %s7 = scalar_select 0, %s6, %s4
  $region1: #{tpu_custom_call.1} parent=0
    #allocation2 [shape = 'u8[16384]{0}', space=vmem, size = 0x4000, scoped, tag = 'input window, operand 0']
    #allocation3 [shape = 's32[2]{0}', space=sflag, size = 0x8, scoped, tag = 'scoped memory for tpu_custom_call.1']
    #allocation4 [shape = 's32[2]{0}', space=sflag, size = 0x8, scoped, tag = 'scoped memory for tpu_custom_call.1']
    #allocation5 [shape = 'u8[65536]{0}', space=vmem, size = 0x10000, scoped, tag = 'input window, operand 1, single buffered']
    #allocation6 [shape = 's32[1]{0}', space=sflag, size = 0x4, scoped, tag = 'scoped memory for tpu_custom_call.1']
    #allocation7 [shape = 'u8[32768]{0}', space=vmem, size = 0x8000, scoped, tag = 'output window, operand 0']
    %8 = vsyncpa [#allocation3], 0
    %s9 = scalar_lea.sflag [#allocation3], 1
    %10 = vsyncpa %s9, 0
    %11 = vsyncpa [#allocation6], 0
    %12 = vsyncpa [#allocation4], 0
    %s13 = scalar_lea.sflag [#allocation4], 1
    %14 = vsyncpa %s13, 0
    loop: start=0, step=1, limit=4
    $region2: #{tpu_custom_call.1} parent=1 // loop_pre_header
      _
    $region3: #{tpu_custom_call.1} parent=1 // loop_header
      %s16 = sphi 0, %s20
      %p17 = scmp.ge.s32.totalorder %s16, 4
      %s26 = sphi 0, %s28
      %s29 = sphi 0, %s26
      %s30 = sphi 0, %s29
      %s46 = sphi 0, %s30
      %s50 = sphi 0, %s50
      %s52 = sphi 0, %s50
      %s53 = sphi 0, %s52
      %s67 = sphi 0, %s53
      %s71 = sphi 0, %s71
      %s73 = sphi 0, %s71
      %s74 = sphi 0, %s73
      %s88 = sphi 0, %s74
      %s94 = sphi 0, %s96
      %s97 = sphi 0, %s94
      %s98 = sphi 0, %s97
      %s114 = sphi 0, %s98
    $region4: #{tpu_custom_call.1} parent=1 // loop_header_branch
      %19 = sbr.rel (%p17) target = $region8
    $region5: #{tpu_custom_call.1} parent=1 // loop_body
      %s21 = ssub.s32 %s16, 1
      %s22 = ssub.s32 %s16, 2
      %s23 = sadd.s32 %s16, 1
      %s24 = ssub.s32 %s16, %s23
      %p25 = scmp.eq.s32.totalorder %s24, 0
      %s27 = sadd.s32 %s26, 1
      %s28 = scalar_select %p25, %s26, %s27
      %p31 = pneg %p25
      %p32 = scmp.eq.s32.totalorder %s16, 1
      %p33 = por %p31, %p32
      %p34 = scmp.ne.s32.totalorder %s26, %s29
      %p35 = scmp.eq.s32.totalorder %s16, 0
      %p36 = por %p34, %p35
      %p37 = scmp.ne.s32.totalorder %s26, %s29
      %p38 = scmp.eq.s32.totalorder %s21, 1
      %p39 = por %p37, %p38
      %p40 = scmp.ne.s32.totalorder %s29, %s30
      %p41 = scmp.eq.s32.totalorder %s21, 0
      %p42 = por %p40, %p41
      %p43 = scmp.ne.s32.totalorder %s29, %s30
      %p44 = scmp.eq.s32.totalorder %s22, 1
      %p45 = por %p43, %p44
      %p47 = scmp.ne.s32.totalorder %s30, %s46
      %p48 = scmp.eq.s32.totalorder %s22, 0
      %p49 = por %p47, %p48
      %s51 = sadd.s32 %s50, 1
      %p54 = scmp.eq.s32.totalorder %s16, 1
      %p55 = scmp.ne.s32.totalorder %s50, %s52
      %p56 = scmp.eq.s32.totalorder %s16, 0
      %p57 = por %p55, %p56
      %p58 = scmp.ne.s32.totalorder %s50, %s52
      %p59 = scmp.eq.s32.totalorder %s21, 1
      %p60 = por %p58, %p59
      %p61 = scmp.ne.s32.totalorder %s52, %s53
      %p62 = scmp.eq.s32.totalorder %s21, 0
      %p63 = por %p61, %p62
      %p64 = scmp.ne.s32.totalorder %s52, %s53
      %p65 = scmp.eq.s32.totalorder %s22, 1
      %p66 = por %p64, %p65
      %p68 = scmp.ne.s32.totalorder %s53, %s67
      %p69 = scmp.eq.s32.totalorder %s22, 0
      %p70 = por %p68, %p69
      %s72 = sadd.s32 %s71, 1
      %p75 = scmp.eq.s32.totalorder %s16, 1
      %p76 = scmp.ne.s32.totalorder %s71, %s73
      %p77 = scmp.eq.s32.totalorder %s16, 0
      %p78 = por %p76, %p77
      %p79 = scmp.ne.s32.totalorder %s71, %s73
      %p80 = scmp.eq.s32.totalorder %s21, 1
      %p81 = por %p79, %p80
      %p82 = scmp.ne.s32.totalorder %s73, %s74
      %p83 = scmp.eq.s32.totalorder %s21, 0
      %p84 = por %p82, %p83
      %p85 = scmp.ne.s32.totalorder %s73, %s74
      %p86 = scmp.eq.s32.totalorder %s22, 1
      %p87 = por %p85, %p86
      %p89 = scmp.ne.s32.totalorder %s74, %s88
      %p90 = scmp.eq.s32.totalorder %s22, 0
      %p91 = por %p89, %p90
      %s92 = ssub.s32 %s16, %s23
      %p93 = scmp.eq.s32.totalorder %s92, 0
      %s95 = sadd.s32 %s94, 1
      %s96 = scalar_select %p93, %s94, %s95
      %p99 = pneg %p93
      %p100 = scmp.eq.s32.totalorder %s16, 1
      %p101 = por %p99, %p100
      %p102 = scmp.ne.s32.totalorder %s94, %s97
      %p103 = scmp.eq.s32.totalorder %s16, 0
      %p104 = por %p102, %p103
      %p105 = scmp.ne.s32.totalorder %s94, %s97
      %p106 = scmp.eq.s32.totalorder %s21, 1
      %p107 = por %p105, %p106
      %p108 = scmp.ne.s32.totalorder %s97, %s98
      %p109 = scmp.eq.s32.totalorder %s21, 0
      %p110 = por %p108, %p109
      %p111 = scmp.ne.s32.totalorder %s97, %s98
      %p112 = scmp.eq.s32.totalorder %s22, 1
      %p113 = por %p111, %p112
      %p115 = scmp.ne.s32.totalorder %s98, %s114
      %p116 = scmp.eq.s32.totalorder %s22, 0
      %p117 = por %p115, %p116
      %p118 = scmp.le.s32.totalorder 1, %s16
      %p119 = scmp.lt.s32.totalorder %s16, 3
      %p120 = pnand %p118, %p119
      %p121 = pneg %p120
      // Predicated region
      $region9: #{tpu_custom_call.1} parent=5 // pred_check
        _
      $region10: #{tpu_custom_call.1} parent=5 // pred_check_branch
        %123 = sbr.rel (%p120) target = $region12
      $region11: #{tpu_custom_call.1} parent=5 // pred_region
        %s124 = ssub.s32 %s16, 1
        // Predicated region
        $region13: #{tpu_custom_call.1} parent=11 // pred_check
          %p125 = pneg %p63
        $region14: #{tpu_custom_call.1} parent=11 // pred_check_branch
          %127 = sbr.rel (%p125) target = $region16
        $region15: #{tpu_custom_call.1} parent=11 // pred_region
          %s129 = ssub.s32 2048, 2048
          %130 = vsyncadd [#allocation6], %s129
          %s131 = sshll.u32 [#allocation5], 4
          %s132 = int_to_ptr.vmem [resolvable:$true] %s131
          %137 = dma.hbm_to_vmem [thread:$0]  %s1, 2048, %s132, [#allocation6], 256, 256, 16
        $region16: #{tpu_custom_call.1} parent=11 // pred_fallthru
          _
        // Predicated region
        $region17: #{tpu_custom_call.1} parent=11 // pred_check
          %p138 = pneg %p84
        $region18: #{tpu_custom_call.1} parent=11 // pred_check_branch
          %140 = sbr.rel (%p138) target = $region20
        $region19: #{tpu_custom_call.1} parent=11 // pred_region
          _
        $region20: #{tpu_custom_call.1} parent=11 // pred_fallthru
          _
      $region12: #{tpu_custom_call.1} parent=5 // pred_fallthru
        _
      %p141 = scmp.lt.s32.totalorder %s16, 2
      // Predicated region
      $region21: #{tpu_custom_call.1} parent=5 // pred_check
        %p142 = pneg %p141
      $region22: #{tpu_custom_call.1} parent=5 // pred_check_branch
        %144 = sbr.rel (%p142) target = $region24
      $region23: #{tpu_custom_call.1} parent=5 // pred_region
        // Predicated region
        $region25: #{tpu_custom_call.1} parent=23 // pred_check
          %p145 = pneg %p36
        $region26: #{tpu_custom_call.1} parent=23 // pred_check_branch
          %147 = sbr.rel (%p145) target = $region28
        $region27: #{tpu_custom_call.1} parent=23 // pred_region
          %s148 = sand.u32 %s26, 1
          %s149 = scalar_lea.sflag [#allocation3], %s148
          %s150 = sand.u32 %s26, 1
          %s151 = smul.addr %s150, 16
          %s152 = scalar_lea.vmem [#allocation2], %s151
          %s153 = smul.u32 2, %s16
          %s154 = ssub.s32 3, %s153
          %p155 = scmp.lt.s32.totalorder %s154, 2
          %s156 = scalar_select %p155, %s154, 2
          %s157 = smul.u32 128, %s156
          %s159 = ssub.s32 256, %s157
          %160 = vsyncadd %s149, %s159
          %p161 = scmp.ne.s32.totalorder 0, %s157
          %s162 = smul.addr %s153, 128
          %s163 = scalar_lea.hbm %s0, %s162
          %s164 = smul.u32 8, %s156
          %s165 = sshll.u32 %s152, 4
          %s166 = int_to_ptr.vmem [resolvable:$true] %s165
          %s167 = sshll.u32 %s164, 4
          %171 = dma.hbm_to_vmem [thread:$0]  (%p161), %s163, %s167, %s166, %s149, 128, 128, 8
        $region28: #{tpu_custom_call.1} parent=23 // pred_fallthru
          _
      $region24: #{tpu_custom_call.1} parent=5 // pred_fallthru
        _
      %p172 = scmp.le.s32.totalorder 1, %s16
      %p173 = scmp.lt.s32.totalorder %s16, 3
      %p174 = pnand %p172, %p173
      %p175 = pneg %p174
      // Predicated region
      $region29: #{tpu_custom_call.1} parent=5 // pred_check
        _
      $region30: #{tpu_custom_call.1} parent=5 // pred_check_branch
        %177 = sbr.rel (%p174) target = $region32
      $region31: #{tpu_custom_call.1} parent=5 // pred_region
        %s178 = ssub.s32 %s16, 1
        %s179 = sand.u32 %s29, 1
        %s180 = scalar_lea.sflag [#allocation3], %s179
        %s181 = sand.u32 %s29, 1
        %s182 = smul.addr %s181, 16
        %s183 = scalar_lea.vmem [#allocation2], %s182
        // Predicated region
        $region33: #{tpu_custom_call.1} parent=31 // pred_check
          %p184 = pneg %p42
        $region34: #{tpu_custom_call.1} parent=31 // pred_check_branch
          %186 = sbr.rel (%p184) target = $region36
        $region35: #{tpu_custom_call.1} parent=31 // pred_region
          %187 = dma.done %s180, 256
        $region36: #{tpu_custom_call.1} parent=31 // pred_fallthru
          _
        // Predicated region
        $region37: #{tpu_custom_call.1} parent=31 // pred_check
          %p188 = pneg %p63
        $region38: #{tpu_custom_call.1} parent=31 // pred_check_branch
          %190 = sbr.rel (%p188) target = $region40
        $region39: #{tpu_custom_call.1} parent=31 // pred_region
          %191 = dma.done [#allocation6], 2048
        $region40: #{tpu_custom_call.1} parent=31 // pred_fallthru
          _
        %s192 = sand.u32 %s29, 1
        %s193 = scalar_lea.sflag [#allocation3], %s192
        %s194 = sand.u32 %s29, 1
        %s195 = smul.addr %s194, 16
        %s196 = scalar_lea.vmem [#allocation2], %s195
        %p197 = pneg %p42
        %p198 = pneg %p39
        %p199 = pneg %p63
        %p200 = pneg %p60
        %p201 = pneg %p84
        %p202 = pneg %p81
        %p203 = pneg %p110
        %p204 = pneg %p107
        %s205 = sand.u32 %s97, 1
        %s206 = scalar_lea.sflag [#allocation4], %s205
        %s207 = sand.u32 %s97, 1
        %s208 = smul.addr %s207, 32
        %s209 = scalar_lea.vmem [#allocation7], %s208
        %s210 = smul.u32 2, %s21
        %s211 = ssub.s32 3, %s210
        %p212 = scmp.lt.s32.totalorder %s211, 2
        %s213 = scalar_select %p212, %s211, 2
        %s214 = smul.u32 128, %s213
        %s215 = smul.u32 2, %s21
        %s216 = ssub.s32 3, %s215
        %p217 = scmp.lt.s32.totalorder %s216, 2
        %s218 = scalar_select %p217, %s216, 2
        %s219 = smul.u32 128, %s218
        %s220 = smul.u32 %s219, 2
        %v221 = vld [vmem:[%s183] sm:$0xff]
        %v222 = vld [vmem:[%s183 + $0x8] sm:$0xff]
        %v223 = vld [vmem:[#allocation5] sm:$0xff]
        %v224 = vld [vmem:[#allocation5 + $0x8] sm:$0xff]
        %v225 = vld [vmem:[#allocation5 + $0x10] sm:$0xff]
        %v226 = vld [vmem:[#allocation5 + $0x18] sm:$0xff]
        %v227 = vld [vmem:[#allocation5 + $0x20] sm:$0xff]
        %v228 = vld [vmem:[#allocation5 + $0x28] sm:$0xff]
        %v229 = vld [vmem:[#allocation5 + $0x30] sm:$0xff]
        %v230 = vld [vmem:[#allocation5 + $0x38] sm:$0xff]
        %v231 = vld [vmem:[#allocation5 + $0x40] sm:$0xff]
        %v232 = vld [vmem:[#allocation5 + $0x48] sm:$0xff]
        %v233 = vld [vmem:[#allocation5 + $0x50] sm:$0xff]
        %v234 = vld [vmem:[#allocation5 + $0x58] sm:$0xff]
        %v235 = vld [vmem:[#allocation5 + $0x60] sm:$0xff]
        %v236 = vld [vmem:[#allocation5 + $0x68] sm:$0xff]
        %v237 = vld [vmem:[#allocation5 + $0x70] sm:$0xff]
        %v238 = vld [vmem:[#allocation5 + $0x78] sm:$0xff]
        %v239 = vld [vmem:[%s2] sm:$0x3]
        %v241 = vlaneseq
        %v242 = vshrl.u32 %v241, 7
        %v243 = vsub.s32 0, %v242
        %v244 = vrot.slane %v239, %v243
        %v245 = vlaneseq
        %v246 = vshrl.u32 %v245, 7
        %v247 = vsub.s32 1, %v246
        %v248 = vrot.slane %v239, %v247
        %vm251 = vcmask 523264
        %v253 = vsel %vm251, %v221, 0
        %v256 = vsel %vm251, %v222, 0
        %258 = vmatprep.subr.mxu0 %v224
        %259 = vmatpush1.msra.mxu0 %v223
        %260 = vmatprep.subr.mxu0 %v226
        %261 = vmatpush1.msra.mxu0 %v225
        %262 = vmatprep.subr.mxu0 %v228
        %263 = vmatpush1.msra.mxu0 %v227
        %264 = vmatprep.subr.mxu0 %v230
        %265 = vmatpush1.msra.mxu0 %v229
        %266 = vmatprep.subr.mxu0 %v232
        %267 = vmatpush1.msra.mxu0 %v231
        %268 = vmatprep.subr.mxu0 %v234
        %269 = vmatpush1.msra.mxu0 %v233
        %270 = vmatprep.subr.mxu0 %v236
        %271 = vmatpush1.msra.mxu0 %v235
        %272 = vmatprep.subr.mxu0 %v238
        %273 = vmatpush1.msra.mxu0 %v237
        %274 = vmatprep.subr.mxu0 0.0
        %275 = vmatpush1.msra.mxu0 0.0
        %276 = vmatprep.subr.mxu0 0.0
        %277 = vmatpush1.msra.mxu0 0.0
        %278 = vmatprep.subr.mxu0 0.0
        %279 = vmatpush1.msra.mxu0 0.0
        %280 = vmatprep.subr.mxu0 0.0
        %281 = vmatpush1.msra.mxu0 0.0
        %282 = vmatprep.subr.mxu0 0.0
        %283 = vmatpush1.msra.mxu0 0.0
        %284 = vmatprep.subr.mxu0 0.0
        %285 = vmatpush1.msra.mxu0 0.0
        %286 = vmatprep.subr.mxu0 0.0
        %287 = vmatpush1.msra.mxu0 0.0
        %288 = vmatprep.subr.mxu0 0.0
        %289 = vmatpush1.msra.mxu0 0.0
        %290 = vmatprep.subr.mxu0 0.0
        %291 = vmatpush1.msra.mxu0 0.0
        %292 = vmatprep.subr.mxu0 0.0
        %293 = vmatpush1.msra.mxu0 0.0
        %294 = vmatprep.subr.mxu0 0.0
        %295 = vmatpush1.msra.mxu0 0.0
        %296 = vmatprep.subr.mxu0 0.0
        %297 = vmatpush1.msra.mxu0 0.0
        %298 = vmatprep.subr.mxu0 0.0
        %299 = vmatpush1.msra.mxu0 0.0
        %300 = vmatprep.subr.mxu0 0.0
        %301 = vmatpush1.msra.mxu0 0.0
        %302 = vmatprep.subr.mxu0 0.0
        %303 = vmatpush1.msra.mxu0 0.0
        %304 = vmatprep.subr.mxu0 0.0
        %305 = vmatpush1.msra.mxu0 0.0
        %306 = vmatprep.subr.mxu0 0.0
        %307 = vmatpush1.msra.mxu0 0.0
        %308 = vmatprep.subr.mxu0 0.0
        %309 = vmatpush1.msra.mxu0 0.0
        %310 = vmatprep.subr.mxu0 0.0
        %311 = vmatpush1.msra.mxu0 0.0
        %312 = vmatprep.subr.mxu0 0.0
        %313 = vmatpush1.msra.mxu0 0.0
        %314 = vmatprep.subr.mxu0 0.0
        %315 = vmatpush1.msra.mxu0 0.0
        %316 = vmatprep.subr.mxu0 0.0
        %317 = vmatpush1.msra.mxu0 0.0
        %318 = vmatprep.subr.mxu0 0.0
        %319 = vmatpush1.msra.mxu0 0.0
        %320 = vmatprep.subr.mxu0 0.0
        %321 = vmatpush1.msra.mxu0 0.0
        %322 = vmatprep.mubr.f32.mxu0 0.0
        %323 = vmatmul.mubr.f32.gmra.mrb[0].mxu0 %v253
        %v324 = vpop.f32.mrb[0].mxu0
        %v325 = vadd.f32 %v244, %v324
        %v326 = vpop.f32.mrb[0].mxu0
        %v327 = vadd.f32 %v248, %v326
        %328 = vmatprep.mubr.f32.mxu0 0.0
        %329 = vmatmul.mubr.f32.gmra.mrb[0].mxu0 %v256
        %v330 = vpop.f32.mrb[0].mxu0
        %v331 = vadd.f32 %v244, %v330
        %v332 = vpop.f32.mrb[0].mxu0
        %v333 = vadd.f32 %v248, %v332
        %334 = vdwg.mxu0
        %v335 = vmul.f32 %v325, %v325
        %v336 = vmul.f32 %v327, %v327
        %v337 = vmul.f32 %v331, %v331
        %v338 = vmul.f32 %v333, %v333
        %v339 = vadd.f32 %v335, %v336
        %340 = vadd.xlane.f32.xlu0 %v339
        %v341 = vpop.xlane.xlu0 %340
        %v342 = vadd.f32 %v337, %v338
        %343 = vadd.xlane.f32.xlu0 %v342
        %v344 = vpop.xlane.xlu0 %343
        %v345 = vrsqrt.pop %v341
        %v346 = vmul.f32 %v341, %v345
        %vm347 = vcmp.eq.f32.partialorder %v341, inf
        %v348 = vsel %vm347, %v341, %v346
        %vm349 = vcmp.eq.f32.partialorder %v341, 0.0
        %v350 = vand.u32 %v341, 2147483648
        %v351 = vsel %vm349, %v350, %v348
        %v352 = vrsqrt.pop %v344
        %v353 = vmul.f32 %v344, %v352
        %vm354 = vcmp.eq.f32.partialorder %v344, inf
        %v355 = vsel %vm354, %v344, %v353
        %vm356 = vcmp.eq.f32.partialorder %v344, 0.0
        %v357 = vand.u32 %v344, 2147483648
        %v358 = vsel %vm356, %v357, %v355
        %v359 = vadd.f32 %v351, 1e-08
        %v360 = vadd.f32 %v358, 1e-08
        %v361 = vrcp.pop %v359
        %v362 = vmul.f32 %v325, %v361
        %v363 = vmul.f32 %v327, %v361
        %v364 = vrcp.pop %v360
        %v365 = vmul.f32 %v331, %v364
        %v366 = vmul.f32 %v333, %v364
        %367 = vst [vmem:[%s209] sm:$0xff] %v362
        %368 = vst [vmem:[%s209 + $0x8] sm:$0xff] %v363
        %369 = vst [vmem:[%s209 + $0x10] sm:$0xff] %v365
        %370 = vst [vmem:[%s209 + $0x18] sm:$0xff] %v366
        %s371 = sand.u32 %s97, 1
        %s372 = scalar_lea.sflag [#allocation4], %s371
        %s373 = sand.u32 %s97, 1
        %s374 = smul.addr %s373, 32
        %s375 = scalar_lea.vmem [#allocation7], %s374
        // Predicated region
        $region41: #{tpu_custom_call.1} parent=31 // pred_check
          %p376 = pneg %p107
        $region42: #{tpu_custom_call.1} parent=31 // pred_check_branch
          %378 = sbr.rel (%p376) target = $region44
        $region43: #{tpu_custom_call.1} parent=31 // pred_region
          %s379 = smul.u32 2, %s21
          %s380 = ssub.s32 3, %s379
          %p381 = scmp.lt.s32.totalorder %s380, 2
          %s382 = scalar_select %p381, %s380, 2
          %s383 = smul.u32 128, %s382
          %s384 = smul.u32 %s383, 2
          %s386 = ssub.s32 512, %s384
          %387 = vsyncadd %s372, %s386
          %p388 = scmp.ne.s32.totalorder 0, %s384
          %s389 = smul.addr %s379, 2
          %s390 = smul.addr %s389, 128
          %s391 = scalar_lea.hbm %s3, %s390
          %s392 = smul.u32 16, %s382
          %s393 = sshll.u32 %s375, 4
          %s394 = int_to_ptr.vmem [resolvable:$true] %s393
          %s395 = sshll.u32 %s392, 4
          %399 = dma.vmem_to_hbm [thread:$0]  (%p388), %s394, %s395, %s391, %s372, 256, 256, 16
        $region44: #{tpu_custom_call.1} parent=31 // pred_fallthru
          _
      $region32: #{tpu_custom_call.1} parent=5 // pred_fallthru
        _
      %p400 = scmp.le.s32.totalorder 2, %s16
      // Predicated region
      $region45: #{tpu_custom_call.1} parent=5 // pred_check
        %p401 = pneg %p400
      $region46: #{tpu_custom_call.1} parent=5 // pred_check_branch
        %403 = sbr.rel (%p401) target = $region48
      $region47: #{tpu_custom_call.1} parent=5 // pred_region
        %s404 = ssub.s32 %s16, 2
        // Predicated region
        $region49: #{tpu_custom_call.1} parent=47 // pred_check
          %p405 = pneg %p113
        $region50: #{tpu_custom_call.1} parent=47 // pred_check_branch
          %407 = sbr.rel (%p405) target = $region52
        $region51: #{tpu_custom_call.1} parent=47 // pred_region
          %s408 = sand.u32 %s98, 1
          %s409 = scalar_lea.sflag [#allocation4], %s408
          %s410 = sand.u32 %s98, 1
          %s411 = smul.addr %s410, 32
          %s412 = scalar_lea.vmem [#allocation7], %s411
          %413 = dma.done %s409, 512
        $region52: #{tpu_custom_call.1} parent=47 // pred_fallthru
          _
      $region48: #{tpu_custom_call.1} parent=5 // pred_fallthru
        _
    $region6: #{tpu_custom_call.1} parent=1 // loop_footer
      %s20 = sadd.s32 1, %s16
    $region7: #{tpu_custom_call.1} parent=1 // loop_footer_branch
      %15 = sbr.rel target = $region3
    $region8: #{tpu_custom_call.1} parent=1 // loop_exit
      _
    %414 = vsyncpa [#allocation3], 1
    %s415 = scalar_lea.sflag [#allocation3], 1
    %416 = vsyncpa %s415, 1
    %417 = vsyncpa [#allocation6], 1
    %418 = vsyncpa [#allocation4], 1
    %s419 = scalar_lea.sflag [#allocation4], 1
    %420 = vsyncpa %s419, 1

// kernel: tpu_custom_call.1
$region0: #{tpu_custom_call.1}
  #allocation0 [shape = 'u32[]', space=smem, size = 0x4, offset = 0x4, fixed_abs, tag = 'smem constant byte address 0x4 - core index']
  #allocation1 [shape = 'u32[144,128]{1,0:T(1,128)}', space=vmem, size = 0x12000, scoped, tag = 'internal scratch']
  %s0 = inlined_call_operand.hbm [shape: f32[20,64], index: 0, kind: input, shape index: {}]
  %s1 = inlined_call_operand.hbm [shape: f32[64,256], index: 1, kind: input, shape index: {}]
  %s2 = inlined_call_operand.vmem [shape: f32[1,256], index: 2, kind: input, shape index: {}]
  %s3 = inlined_call_operand.hbm [shape: f32[20,256], index: 3, kind: output, shape index: {}]
  %s4 = sld [smem:[#allocation0]]
  $region53: #{tpu_custom_call.1} parent=0
    _
  %s6 = ssub.s32 1, %s4
  %s7 = scalar_select 0, %s6, %s4
  $region1: #{tpu_custom_call.1} parent=0
    #allocation2 [shape = 'u8[16384]{0}', space=vmem, size = 0x4000, scoped, tag = 'input window, operand 0']
    #allocation3 [shape = 's32[2]{0}', space=sflag, size = 0x8, scoped, tag = 'scoped memory for tpu_custom_call.1']
    #allocation4 [shape = 's32[2]{0}', space=sflag, size = 0x8, scoped, tag = 'scoped memory for tpu_custom_call.1']
    #allocation5 [shape = 'u8[65536]{0}', space=vmem, size = 0x10000, scoped, tag = 'input window, operand 1, single buffered']
    #allocation6 [shape = 's32[1]{0}', space=sflag, size = 0x4, scoped, tag = 'scoped memory for tpu_custom_call.1']
    #allocation7 [shape = 'u8[32768]{0}', space=vmem, size = 0x8000, scoped, tag = 'output window, operand 0']
    %8 = vsyncpa [#allocation3], 0
    %s9 = scalar_lea.sflag [#allocation3], 1
    %10 = vsyncpa %s9, 0
    %11 = vsyncpa [#allocation6], 0
    %12 = vsyncpa [#allocation4], 0
    %s13 = scalar_lea.sflag [#allocation4], 1
    %14 = vsyncpa %s13, 0
    loop: start=0, step=1, limit=4
    $region2: #{tpu_custom_call.1} parent=1 // loop_pre_header
      _
    $region3: #{tpu_custom_call.1} parent=1 // loop_header
      %s16 = sphi 0, %s20
      %p17 = scmp.ge.s32.totalorder %s16, 4
      %s26 = sphi 0, %s28
      %s29 = sphi 0, %s26
      %s30 = sphi 0, %s29
      %s46 = sphi 0, %s30
      %s50 = sphi 0, %s50
      %s52 = sphi 0, %s50
      %s53 = sphi 0, %s52
      %s67 = sphi 0, %s53
      %s71 = sphi 0, %s71
      %s73 = sphi 0, %s71
      %s74 = sphi 0, %s73
      %s88 = sphi 0, %s74
      %s94 = sphi 0, %s96
      %s97 = sphi 0, %s94
      %s98 = sphi 0, %s97
      %s114 = sphi 0, %s98
    $region4: #{tpu_custom_call.1} parent=1 // loop_header_branch
      %19 = sbr.rel (%p17) target = $region8
    $region5: #{tpu_custom_call.1} parent=1 // loop_body
      %s21 = ssub.s32 %s16, 1
      %s22 = ssub.s32 %s16, 2
      %s23 = sadd.s32 %s16, 1
      %s24 = ssub.s32 %s16, %s23
      %p25 = scmp.eq.s32.totalorder %s24, 0
      %s27 = sadd.s32 %s26, 1
      %s28 = scalar_select %p25, %s26, %s27
      %p31 = pneg %p25
      %p32 = scmp.eq.s32.totalorder %s16, 1
      %p33 = por %p31, %p32
      %p34 = scmp.ne.s32.totalorder %s26, %s29
      %p35 = scmp.eq.s32.totalorder %s16, 0
      %p36 = por %p34, %p35
      %p37 = scmp.ne.s32.totalorder %s26, %s29
      %p38 = scmp.eq.s32.totalorder %s21, 1
      %p39 = por %p37, %p38
      %p40 = scmp.ne.s32.totalorder %s29, %s30
      %p41 = scmp.eq.s32.totalorder %s21, 0
      %p42 = por %p40, %p41
      %p43 = scmp.ne.s32.totalorder %s29, %s30
      %p44 = scmp.eq.s32.totalorder %s22, 1
      %p45 = por %p43, %p44
      %p47 = scmp.ne.s32.totalorder %s30, %s46
      %p48 = scmp.eq.s32.totalorder %s22, 0
      %p49 = por %p47, %p48
      %s51 = sadd.s32 %s50, 1
      %p54 = scmp.eq.s32.totalorder %s16, 1
      %p55 = scmp.ne.s32.totalorder %s50, %s52
      %p56 = scmp.eq.s32.totalorder %s16, 0
      %p57 = por %p55, %p56
      %p58 = scmp.ne.s32.totalorder %s50, %s52
      %p59 = scmp.eq.s32.totalorder %s21, 1
      %p60 = por %p58, %p59
      %p61 = scmp.ne.s32.totalorder %s52, %s53
      %p62 = scmp.eq.s32.totalorder %s21, 0
      %p63 = por %p61, %p62
      %p64 = scmp.ne.s32.totalorder %s52, %s53
      %p65 = scmp.eq.s32.totalorder %s22, 1
      %p66 = por %p64, %p65
      %p68 = scmp.ne.s32.totalorder %s53, %s67
      %p69 = scmp.eq.s32.totalorder %s22, 0
      %p70 = por %p68, %p69
      %s72 = sadd.s32 %s71, 1
      %p75 = scmp.eq.s32.totalorder %s16, 1
      %p76 = scmp.ne.s32.totalorder %s71, %s73
      %p77 = scmp.eq.s32.totalorder %s16, 0
      %p78 = por %p76, %p77
      %p79 = scmp.ne.s32.totalorder %s71, %s73
      %p80 = scmp.eq.s32.totalorder %s21, 1
      %p81 = por %p79, %p80
      %p82 = scmp.ne.s32.totalorder %s73, %s74
      %p83 = scmp.eq.s32.totalorder %s21, 0
      %p84 = por %p82, %p83
      %p85 = scmp.ne.s32.totalorder %s73, %s74
      %p86 = scmp.eq.s32.totalorder %s22, 1
      %p87 = por %p85, %p86
      %p89 = scmp.ne.s32.totalorder %s74, %s88
      %p90 = scmp.eq.s32.totalorder %s22, 0
      %p91 = por %p89, %p90
      %s92 = ssub.s32 %s16, %s23
      %p93 = scmp.eq.s32.totalorder %s92, 0
      %s95 = sadd.s32 %s94, 1
      %s96 = scalar_select %p93, %s94, %s95
      %p99 = pneg %p93
      %p100 = scmp.eq.s32.totalorder %s16, 1
      %p101 = por %p99, %p100
      %p102 = scmp.ne.s32.totalorder %s94, %s97
      %p103 = scmp.eq.s32.totalorder %s16, 0
      %p104 = por %p102, %p103
      %p105 = scmp.ne.s32.totalorder %s94, %s97
      %p106 = scmp.eq.s32.totalorder %s21, 1
      %p107 = por %p105, %p106
      %p108 = scmp.ne.s32.totalorder %s97, %s98
      %p109 = scmp.eq.s32.totalorder %s21, 0
      %p110 = por %p108, %p109
      %p111 = scmp.ne.s32.totalorder %s97, %s98
      %p112 = scmp.eq.s32.totalorder %s22, 1
      %p113 = por %p111, %p112
      %p115 = scmp.ne.s32.totalorder %s98, %s114
      %p116 = scmp.eq.s32.totalorder %s22, 0
      %p117 = por %p115, %p116
      %p118 = scmp.le.s32.totalorder 1, %s16
      %p119 = scmp.lt.s32.totalorder %s16, 3
      %p120 = pnand %p118, %p119
      %p121 = pneg %p120
      // Predicated region
      $region9: #{tpu_custom_call.1} parent=5 // pred_check
        _
      $region10: #{tpu_custom_call.1} parent=5 // pred_check_branch
        %123 = sbr.rel (%p120) target = $region12
      $region11: #{tpu_custom_call.1} parent=5 // pred_region
        %s124 = ssub.s32 %s16, 1
        // Predicated region
        $region13: #{tpu_custom_call.1} parent=11 // pred_check
          %p125 = pneg %p63
        $region14: #{tpu_custom_call.1} parent=11 // pred_check_branch
          %127 = sbr.rel (%p125) target = $region16
        $region15: #{tpu_custom_call.1} parent=11 // pred_region
          %s129 = ssub.s32 2048, 2048
          %130 = vsyncadd [#allocation6], %s129
          %s131 = sshll.u32 [#allocation5], 4
          %s132 = int_to_ptr.vmem [resolvable:$true] %s131
          %137 = dma.hbm_to_vmem [thread:$0]  %s1, 2048, %s132, [#allocation6], 256, 256, 16
        $region16: #{tpu_custom_call.1} parent=11 // pred_fallthru
          _
        // Predicated region
        $region17: #{tpu_custom_call.1} parent=11 // pred_check
          %p138 = pneg %p84
        $region18: #{tpu_custom_call.1} parent=11 // pred_check_branch
          %140 = sbr.rel (%p138) target = $region20
        $region19: #{tpu_custom_call.1} parent=11 // pred_region
          _
        $region20: #{tpu_custom_call.1} parent=11 // pred_fallthru
          _
      $region12: #{tpu_custom_call.1} parent=5 // pred_fallthru
        _
      %p141 = scmp.lt.s32.totalorder %s16, 2
      // Predicated region
      $region21: #{tpu_custom_call.1} parent=5 // pred_check
        %p142 = pneg %p141
      $region22: #{tpu_custom_call.1} parent=5 // pred_check_branch
        %144 = sbr.rel (%p142) target = $region24
      $region23: #{tpu_custom_call.1} parent=5 // pred_region
        // Predicated region
        $region25: #{tpu_custom_call.1} parent=23 // pred_check
          %p145 = pneg %p36
        $region26: #{tpu_custom_call.1} parent=23 // pred_check_branch
          %147 = sbr.rel (%p145) target = $region28
        $region27: #{tpu_custom_call.1} parent=23 // pred_region
          %s148 = sand.u32 %s26, 1
          %s149 = scalar_lea.sflag [#allocation3], %s148
          %s150 = sand.u32 %s26, 1
          %s151 = smul.addr %s150, 16
          %s152 = scalar_lea.vmem [#allocation2], %s151
          %s153 = smul.u32 2, %s16
          %s154 = ssub.s32 3, %s153
          %p155 = scmp.lt.s32.totalorder %s154, 2
          %s156 = scalar_select %p155, %s154, 2
          %s157 = smul.u32 128, %s156
          %s159 = ssub.s32 256, %s157
          %160 = vsyncadd %s149, %s159
          %p161 = scmp.ne.s32.totalorder 0, %s157
          %s162 = smul.addr %s153, 128
          %s163 = scalar_lea.hbm %s0, %s162
          %s164 = smul.u32 8, %s156
          %s165 = sshll.u32 %s152, 4
          %s166 = int_to_ptr.vmem [resolvable:$true] %s165
          %s167 = sshll.u32 %s164, 4
          %171 = dma.hbm_to_vmem [thread:$0]  (%p161), %s163, %s167, %s166, %s149, 128, 128, 8
        $region28: #{tpu_custom_call.1} parent=23 // pred_fallthru
          _
      $region24: #{tpu_custom_call.1} parent=5 // pred_fallthru
        _
      %p172 = scmp.le.s32.totalorder 1, %s16
      %p173 = scmp.lt.s32.totalorder %s16, 3
      %p174 = pnand %p172, %p173
      %p175 = pneg %p174
      // Predicated region
      $region29: #{tpu_custom_call.1} parent=5 // pred_check
        _
      $region30: #{tpu_custom_call.1} parent=5 // pred_check_branch
        %177 = sbr.rel (%p174) target = $region32
      $region31: #{tpu_custom_call.1} parent=5 // pred_region
        %s178 = ssub.s32 %s16, 1
        %s179 = sand.u32 %s29, 1
        %s180 = scalar_lea.sflag [#allocation3], %s179
        %s181 = sand.u32 %s29, 1
        %s182 = smul.addr %s181, 16
        %s183 = scalar_lea.vmem [#allocation2], %s182
        // Predicated region
        $region33: #{tpu_custom_call.1} parent=31 // pred_check
          %p184 = pneg %p42
        $region34: #{tpu_custom_call.1} parent=31 // pred_check_branch
          %186 = sbr.rel (%p184) target = $region36
        $region35: #{tpu_custom_call.1} parent=31 // pred_region
          %187 = dma.done %s180, 256
        $region36: #{tpu_custom_call.1} parent=31 // pred_fallthru
          _
        // Predicated region
        $region37: #{tpu_custom_call.1} parent=31 // pred_check
          %p188 = pneg %p63
        $region38: #{tpu_custom_call.1} parent=31 // pred_check_branch
          %190 = sbr.rel (%p188) target = $region40
        $region39: #{tpu_custom_call.1} parent=31 // pred_region
          %191 = dma.done [#allocation6], 2048
        $region40: #{tpu_custom_call.1} parent=31 // pred_fallthru
          _
        %s192 = sand.u32 %s29, 1
        %s193 = scalar_lea.sflag [#allocation3], %s192
        %s194 = sand.u32 %s29, 1
        %s195 = smul.addr %s194, 16
        %s196 = scalar_lea.vmem [#allocation2], %s195
        %p197 = pneg %p42
        %p198 = pneg %p39
        %p199 = pneg %p63
        %p200 = pneg %p60
        %p201 = pneg %p84
        %p202 = pneg %p81
        %p203 = pneg %p110
        %p204 = pneg %p107
        %s205 = sand.u32 %s97, 1
        %s206 = scalar_lea.sflag [#allocation4], %s205
        %s207 = sand.u32 %s97, 1
        %s208 = smul.addr %s207, 32
        %s209 = scalar_lea.vmem [#allocation7], %s208
        %s210 = smul.u32 2, %s21
        %s211 = ssub.s32 3, %s210
        %p212 = scmp.lt.s32.totalorder %s211, 2
        %s213 = scalar_select %p212, %s211, 2
        %s214 = smul.u32 128, %s213
        %s215 = smul.u32 2, %s21
        %s216 = ssub.s32 3, %s215
        %p217 = scmp.lt.s32.totalorder %s216, 2
        %s218 = scalar_select %p217, %s216, 2
        %s219 = smul.u32 128, %s218
        %s220 = smul.u32 %s219, 2
        %v221 = vld [vmem:[%s183] sm:$0xff]
        %v222 = vld [vmem:[%s183 + $0x8] sm:$0xff]
        %v223 = vld [vmem:[#allocation5] sm:$0xff]
        %v224 = vld [vmem:[#allocation5 + $0x8] sm:$0xff]
        %v225 = vld [vmem:[#allocation5 + $0x10] sm:$0xff]
        %v226 = vld [vmem:[#allocation5 + $0x18] sm:$0xff]
        %v227 = vld [vmem:[#allocation5 + $0x20] sm:$0xff]
        %v228 = vld [vmem:[#allocation5 + $0x28] sm:$0xff]
        %v229 = vld [vmem:[#allocation5 + $0x30] sm:$0xff]
        %v230 = vld [vmem:[#allocation5 + $0x38] sm:$0xff]
        %v231 = vld [vmem:[#allocation5 + $0x40] sm:$0xff]
        %v232 = vld [vmem:[#allocation5 + $0x48] sm:$0xff]
        %v233 = vld [vmem:[#allocation5 + $0x50] sm:$0xff]
        %v234 = vld [vmem:[#allocation5 + $0x58] sm:$0xff]
        %v235 = vld [vmem:[#allocation5 + $0x60] sm:$0xff]
        %v236 = vld [vmem:[#allocation5 + $0x68] sm:$0xff]
        %v237 = vld [vmem:[#allocation5 + $0x70] sm:$0xff]
        %v238 = vld [vmem:[#allocation5 + $0x78] sm:$0xff]
        %v239 = vld [vmem:[%s2] sm:$0x3]
        %v241 = vlaneseq
        %v242 = vshrl.u32 %v241, 7
        %v243 = vsub.s32 0, %v242
        %v244 = vrot.slane %v239, %v243
        %v245 = vlaneseq
        %v246 = vshrl.u32 %v245, 7
        %v247 = vsub.s32 1, %v246
        %v248 = vrot.slane %v239, %v247
        %vm251 = vcmask 523264
        %v253 = vsel %vm251, %v221, 0
        %v256 = vsel %vm251, %v222, 0
        %258 = vmatprep.subr.mxu0 %v224
        %259 = vmatpush1.msra.mxu0 %v223
        %260 = vmatprep.subr.mxu0 %v226
        %261 = vmatpush1.msra.mxu0 %v225
        %262 = vmatprep.subr.mxu0 %v228
        %263 = vmatpush1.msra.mxu0 %v227
        %264 = vmatprep.subr.mxu0 %v230
        %265 = vmatpush1.msra.mxu0 %v229
        %266 = vmatprep.subr.mxu0 %v232
        %267 = vmatpush1.msra.mxu0 %v231
        %268 = vmatprep.subr.mxu0 %v234
        %269 = vmatpush1.msra.mxu0 %v233
        %270 = vmatprep.subr.mxu0 %v236
        %271 = vmatpush1.msra.mxu0 %v235
        %272 = vmatprep.subr.mxu0 %v238
        %273 = vmatpush1.msra.mxu0 %v237
        %274 = vmatprep.subr.mxu0 0.0
        %275 = vmatpush1.msra.mxu0 0.0
        %276 = vmatprep.subr.mxu0 0.0
        %277 = vmatpush1.msra.mxu0 0.0
        %278 = vmatprep.subr.mxu0 0.0
        %279 = vmatpush1.msra.mxu0 0.0
        %280 = vmatprep.subr.mxu0 0.0
        %281 = vmatpush1.msra.mxu0 0.0
        %282 = vmatprep.subr.mxu0 0.0
        %283 = vmatpush1.msra.mxu0 0.0
        %284 = vmatprep.subr.mxu0 0.0
        %285 = vmatpush1.msra.mxu0 0.0
        %286 = vmatprep.subr.mxu0 0.0
        %287 = vmatpush1.msra.mxu0 0.0
        %288 = vmatprep.subr.mxu0 0.0
        %289 = vmatpush1.msra.mxu0 0.0
        %290 = vmatprep.subr.mxu0 0.0
        %291 = vmatpush1.msra.mxu0 0.0
        %292 = vmatprep.subr.mxu0 0.0
        %293 = vmatpush1.msra.mxu0 0.0
        %294 = vmatprep.subr.mxu0 0.0
        %295 = vmatpush1.msra.mxu0 0.0
        %296 = vmatprep.subr.mxu0 0.0
        %297 = vmatpush1.msra.mxu0 0.0
        %298 = vmatprep.subr.mxu0 0.0
        %299 = vmatpush1.msra.mxu0 0.0
        %300 = vmatprep.subr.mxu0 0.0
        %301 = vmatpush1.msra.mxu0 0.0
        %302 = vmatprep.subr.mxu0 0.0
        %303 = vmatpush1.msra.mxu0 0.0
        %304 = vmatprep.subr.mxu0 0.0
        %305 = vmatpush1.msra.mxu0 0.0
        %306 = vmatprep.subr.mxu0 0.0
        %307 = vmatpush1.msra.mxu0 0.0
        %308 = vmatprep.subr.mxu0 0.0
        %309 = vmatpush1.msra.mxu0 0.0
        %310 = vmatprep.subr.mxu0 0.0
        %311 = vmatpush1.msra.mxu0 0.0
        %312 = vmatprep.subr.mxu0 0.0
        %313 = vmatpush1.msra.mxu0 0.0
        %314 = vmatprep.subr.mxu0 0.0
        %315 = vmatpush1.msra.mxu0 0.0
        %316 = vmatprep.subr.mxu0 0.0
        %317 = vmatpush1.msra.mxu0 0.0
        %318 = vmatprep.subr.mxu0 0.0
        %319 = vmatpush1.msra.mxu0 0.0
        %320 = vmatprep.subr.mxu0 0.0
        %321 = vmatpush1.msra.mxu0 0.0
        %322 = vmatprep.mubr.f32.mxu0 0.0
        %323 = vmatmul.mubr.f32.gmra.mrb[0].mxu0 %v253
        %v324 = vpop.f32.mrb[0].mxu0
        %v325 = vadd.f32 %v244, %v324
        %v326 = vpop.f32.mrb[0].mxu0
        %v327 = vadd.f32 %v248, %v326
        %328 = vmatprep.mubr.f32.mxu0 0.0
        %329 = vmatmul.mubr.f32.gmra.mrb[0].mxu0 %v256
        %v330 = vpop.f32.mrb[0].mxu0
        %v331 = vadd.f32 %v244, %v330
        %v332 = vpop.f32.mrb[0].mxu0
        %v333 = vadd.f32 %v248, %v332
        %334 = vdwg.mxu0
        %v335 = vmul.f32 %v325, %v325
        %v336 = vmul.f32 %v327, %v327
        %v337 = vmul.f32 %v331, %v331
        %v338 = vmul.f32 %v333, %v333
        %v339 = vadd.f32 %v335, %v336
        %340 = vadd.xlane.f32.xlu0 %v339
        %v341 = vpop.xlane.xlu0 %340
        %v342 = vadd.f32 %v337, %v338
        %343 = vadd.xlane.f32.xlu0 %v342
        %v344 = vpop.xlane.xlu0 %343
        %v345 = vrsqrt.pop %v341
        %v346 = vmul.f32 %v341, %v345
        %vm347 = vcmp.eq.f32.partialorder %v341, inf
        %v348 = vsel %vm347, %v341, %v346
        %vm349 = vcmp.eq.f32.partialorder %v341, 0.0
        %v350 = vand.u32 %v341, 2147483648
        %v351 = vsel %vm349, %v350, %v348
        %v352 = vrsqrt.pop %v344
        %v353 = vmul.f32 %v344, %v352
        %vm354 = vcmp.eq.f32.partialorder %v344, inf
        %v355 = vsel %vm354, %v344, %v353
        %vm356 = vcmp.eq.f32.partialorder %v344, 0.0
        %v357 = vand.u32 %v344, 2147483648
        %v358 = vsel %vm356, %v357, %v355
        %v359 = vadd.f32 %v351, 1e-08
        %v360 = vadd.f32 %v358, 1e-08
        %v361 = vrcp.pop %v359
        %v362 = vmul.f32 %v325, %v361
        %v363 = vmul.f32 %v327, %v361
        %v364 = vrcp.pop %v360
        %v365 = vmul.f32 %v331, %v364
        %v366 = vmul.f32 %v333, %v364
        %367 = vst [vmem:[%s209] sm:$0xff] %v362
        %368 = vst [vmem:[%s209 + $0x8] sm:$0xff] %v363
        %369 = vst [vmem:[%s209 + $0x10] sm:$0xff] %v365
        %370 = vst [vmem:[%s209 + $0x18] sm:$0xff] %v366
        %s371 = sand.u32 %s97, 1
        %s372 = scalar_lea.sflag [#allocation4], %s371
        %s373 = sand.u32 %s97, 1
        %s374 = smul.addr %s373, 32
        %s375 = scalar_lea.vmem [#allocation7], %s374
        // Predicated region
        $region41: #{tpu_custom_call.1} parent=31 // pred_check
          %p376 = pneg %p107
        $region42: #{tpu_custom_call.1} parent=31 // pred_check_branch
          %378 = sbr.rel (%p376) target = $region44
        $region43: #{tpu_custom_call.1} parent=31 // pred_region
          %s379 = smul.u32 2, %s21
          %s380 = ssub.s32 3, %s379
          %p381 = scmp.lt.s32.totalorder %s380, 2
          %s382 = scalar_select %p381, %s380, 2
          %s383 = smul.u32 128, %s382
          %s384 = smul.u32 %s383, 2
          %s386 = ssub.s32 512, %s384
          %387 = vsyncadd %s372, %s386
          %p388 = scmp.ne.s32.totalorder 0, %s384
          %s389 = smul.addr %s379, 2
          %s390 = smul.addr %s389, 128
          %s391 = scalar_lea.hbm %s3, %s390
          %s392 = smul.u32 16, %s382
          %s393 = sshll.u32 %s375, 4
          %s394 = int_to_ptr.vmem [resolvable:$true] %s393
          %s395 = sshll.u32 %s392, 4
          %399 = dma.vmem_to_hbm [thread:$0]  (%p388), %s394, %s395, %s391, %s372, 256, 256, 16
        $region44: #{tpu_custom_call.1} parent=31 // pred_fallthru
          _
      $region32: #{tpu_custom_call.1} parent=5 // pred_fallthru
        _
      %p400 = scmp.le.s32.totalorder 2, %s16
      // Predicated region
      $region45: #{tpu_custom_call.1} parent=5 // pred_check
        %p401 = pneg %p400
      $region46: #{tpu_custom_call.1} parent=5 // pred_check_branch
        %403 = sbr.rel (%p401) target = $region48
      $region47: #{tpu_custom_call.1} parent=5 // pred_region
        %s404 = ssub.s32 %s16, 2
        // Predicated region
        $region49: #{tpu_custom_call.1} parent=47 // pred_check
          %p405 = pneg %p113
        $region50: #{tpu_custom_call.1} parent=47 // pred_check_branch
          %407 = sbr.rel (%p405) target = $region52
        $region51: #{tpu_custom_call.1} parent=47 // pred_region
          %s408 = sand.u32 %s98, 1
          %s409 = scalar_lea.sflag [#allocation4], %s408
          %s410 = sand.u32 %s98, 1
          %s411 = smul.addr %s410, 32
          %s412 = scalar_lea.vmem [#allocation7], %s411
          %413 = dma.done %s409, 512
        $region52: #{tpu_custom_call.1} parent=47 // pred_fallthru
          _
      $region48: #{tpu_custom_call.1} parent=5 // pred_fallthru
        _
    $region6: #{tpu_custom_call.1} parent=1 // loop_footer
      %s20 = sadd.s32 1, %s16
    $region7: #{tpu_custom_call.1} parent=1 // loop_footer_branch
      %15 = sbr.rel target = $region3
    $region8: #{tpu_custom_call.1} parent=1 // loop_exit
      _
    %414 = vsyncpa [#allocation3], 1
    %s415 = scalar_lea.sflag [#allocation3], 1
    %416 = vsyncpa %s415, 1
    %417 = vsyncpa [#allocation6], 1
    %418 = vsyncpa [#allocation4], 1
    %s419 = scalar_lea.sflag [#allocation4], 1
    %420 = vsyncpa %s419, 1

</llo_original>
